<compile_context>
chip_gen: v7x
topology: tpu7x:2x2x1
jax: 0.10.0
libtpu: 0.0.40
codegen_flags: <defaults>
</compile_context>

<pallas_src>
import functools

import jax
import jax.numpy as jnp
from jax.experimental import pallas as pl
from jax.experimental.pallas import tpu as pltpu


def _gelu_tanh(x):
    # GeLU (tanh approximation) matching the fused bias-gelu used by slapo/epoi.
    return 0.5 * x * (1.0 + jnp.tanh(0.7978845608028654 * (x + 0.044715 * x * x * x)))


def _round_up(n, m):
    return ((n + m - 1) // m) * m


def _vmem_capacity_bytes():
    try:
        cap = int(pltpu.get_tpu_info().vmem_capacity_bytes)
        if cap > 0:
            return cap
    except Exception:
        pass
    return 64 << 20  # conservative fallback == v7x per-TC VMEM


def _estimate_vmem(tm, tk, h_pad):
    # Double-buffered input/output tiles: bf16 x/W blocks, f32 biases + output.
    return 2 * (tm * h_pad * 2        # x tile        (bf16)
                + h_pad * tk * 2      # W1 col block  (bf16)
                + tk * h_pad * 2      # W2 row block  (bf16)
                + tk * 4 + h_pad * 4  # bias blocks   (f32)
                + tm * h_pad * 4)     # out/acc tile  (f32)


def _choose_tiles(m, h_pad, i_pad, cap):
    big_vmem = cap >= (96 << 20)  # 128-MiB parts (v5e/v6e)
    tk = 512 if (big_vmem and i_pad % 512 == 0) else (256 if i_pad % 256 == 0 else 128)
    tm_target = 512 if big_vmem else 384
    budget = cap - (8 << 20)

    tm = min(_round_up(m, 16), tm_target)   # multiple of 16 (bf16 sublanes)
    tm = max(16, tm)
    while tm > 128 and _estimate_vmem(tm, tk, h_pad) > budget:
        tm -= 128
    return tm, tk


def prepare_fused_mlp_params(w1, b1, w2, b2, *, compute_dtype=jnp.bfloat16):
    """Pad lane dims to multiples of 128 and cast to the MXU dtype ONCE.
    Weights are in (in_features, out_features) layout."""
    hidden, inter = w1.shape
    assert w2.shape == (inter, hidden)
    h_pad = _round_up(hidden, 128)
    i_pad = _round_up(inter, 128)
    w1p = jnp.pad(w1, ((0, h_pad - hidden), (0, i_pad - inter))).astype(compute_dtype)
    w2p = jnp.pad(w2, ((0, i_pad - inter), (0, h_pad - hidden))).astype(compute_dtype)
    b1p = jnp.pad(b1, (0, i_pad - inter)).reshape(1, i_pad).astype(jnp.float32)
    b2p = jnp.pad(b2, (0, h_pad - hidden)).reshape(1, h_pad).astype(jnp.float32)
    return w1p, b1p, w2p, b2p


def fused_mlp_kernel(seed_ref,                               # scalar prefetch (SMEM)
                     x_ref, w1_ref, b1_ref, w2_ref, b2_ref,  # inputs (VMEM tiles)
                     o_ref,                                  # f32 output (accumulator)
                     *, keep_threshold, inv_keep, tile_m):
    """Grid point (i, j): accumulate one intermediate block of
       gelu(x @ W1 + b1) @ W2 into the resident (tm, H) f32 output block;
       finalize (bias2 + dropout) at the last j."""
    j = pl.program_id(1)
    nj = pl.num_programs(1)
    # NOTE: pallas primitives (program_id, ...) must be bound at kernel top
    # level, not inside pl.when bodies (no interpret-mode rule there).
    row0 = pl.program_id(0) * tile_m
    if keep_threshold > 0:
        seed_u = seed_ref[0].astype(jnp.uint32)

    @pl.when(j == 0)
    def _init():
        o_ref[...] = jnp.zeros_like(o_ref)

    # ---- fc_in block: (tm, H) @ (H, tk) -> (tm, tk), fused bias + gelu ----
    h = jnp.dot(x_ref[...], w1_ref[...], preferred_element_type=jnp.float32)
    h = _gelu_tanh(h + b1_ref[...])          # b1 is f32 (1, tk), broadcasts

    # ---- fc_out partial: (tm, tk) @ (tk, H), accumulated in the f32 output ----
    o_ref[...] += jnp.dot(h.astype(w2_ref.dtype), w2_ref[...],
                          preferred_element_type=jnp.float32)

    @pl.when(j == nj - 1)
    def _finalize():
        y = o_ref[...] + b2_ref[...]          # b2 is f32 (1, H)

        if keep_threshold > 0:                # static: dropout enabled
            tm_, hp_ = y.shape
            # Row/col mixing terms built as thin vectors (cheap), one
            # broadcast add over the slab, then a lowbias32 finalizer.
            rows = (jax.lax.broadcasted_iota(jnp.int32, (tm_, 1), 0)
                    .astype(jnp.uint32) + row0.astype(jnp.uint32))
            r = rows * jnp.uint32(0x9E3779B1) + seed_u
            c = (jax.lax.broadcasted_iota(jnp.int32, (1, hp_), 1)
                 .astype(jnp.uint32)) * jnp.uint32(0x85EBCA77)
            hb = r + c
            hb = hb ^ (hb >> 16)
            hb = hb * jnp.uint32(0x7FEB352D)
            hb = hb ^ (hb >> 15)
            hb = hb * jnp.uint32(0x846CA68B)
            hb = hb ^ (hb >> 16)
            keep = hb >= jnp.uint32(keep_threshold)   # P(keep) = 1 - p
            y = jnp.where(keep, y * inv_keep, 0.0)

        o_ref[...] = y.astype(o_ref.dtype)


def fused_mlp(x, w1p, b1p, w2p, b2p, *, resid_pdrop=0.1, seed=0,
              compute_dtype=jnp.bfloat16):
    """x: (batch, seq, hidden).  w1p/b1p/w2p/b2p come from
    prepare_fused_mlp_params (pre-padded, pre-cast).  Returns x.dtype."""
    assert 0.0 <= resid_pdrop < 1.0
    batch, seq, hidden = x.shape
    h_pad, i_pad = w1p.shape
    assert h_pad == _round_up(hidden, 128) and w2p.shape == (i_pad, h_pad)
    m = batch * seq

    cap = _vmem_capacity_bytes()
    tm, tk = _choose_tiles(m, h_pad, i_pad, cap)
    m_pad = _round_up(m, tm)

    x2d = x.reshape(m, hidden)
    if (m_pad, h_pad) != (m, hidden):
        x2d = jnp.pad(x2d, ((0, m_pad - m), (0, h_pad - hidden)))
    x2d = x2d.astype(compute_dtype)

    seed_arr = jnp.array([seed], dtype=jnp.int32)

    keep_threshold = min(int(round(float(resid_pdrop) * (2 ** 32))), 2 ** 32 - 1)
    inv_keep = 1.0 / (1.0 - float(resid_pdrop)) if resid_pdrop > 0.0 else 1.0

    kernel = functools.partial(
        fused_mlp_kernel,
        keep_threshold=keep_threshold, inv_keep=inv_keep, tile_m=tm)

    grid = (m_pad // tm, i_pad // tk)
    n_i = m_pad // tm

    vmem_need = _estimate_vmem(tm, tk, h_pad)
    vmem_limit = int(min(max(vmem_need + (4 << 20), 32 << 20),
                         cap - (8 << 20), 100 << 20))

    cost = pl.CostEstimate(
        flops=4 * m_pad * h_pad * i_pad,                   # two matmuls
        transcendentals=m_pad * i_pad,                     # tanh in gelu
        bytes_accessed=(x2d.size * x2d.dtype.itemsize
                        + n_i * (w1p.size * w1p.dtype.itemsize
                                 + w2p.size * w2p.dtype.itemsize)
                        + b1p.size * 4 + b2p.size * 4
                        + m_pad * h_pad * 4))              # f32 output

    out2d = pl.pallas_call(
        kernel,
        out_shape=jax.ShapeDtypeStruct((m_pad, h_pad), jnp.float32),
        grid_spec=pltpu.PrefetchScalarGridSpec(
            num_scalar_prefetch=1,
            grid=grid,
            in_specs=[
                pl.BlockSpec((tm, h_pad), lambda i, j, s: (i, 0)),   # x tile
                pl.BlockSpec((h_pad, tk), lambda i, j, s: (0, j)),   # W1 col-block
                pl.BlockSpec((1, tk),     lambda i, j, s: (0, j)),   # b1 block
                pl.BlockSpec((tk, h_pad), lambda i, j, s: (j, 0)),   # W2 row-block
                pl.BlockSpec((1, h_pad),  lambda i, j, s: (0, 0)),   # b2
            ],
            out_specs=pl.BlockSpec((tm, h_pad), lambda i, j, s: (i, 0)),
        ),
        compiler_params=pltpu.CompilerParams(
            dimension_semantics=("parallel", "arbitrary"),
            vmem_limit_bytes=vmem_limit),
        cost_estimate=cost,
    )(seed_arr, x2d, w1p, b1p, w2p, b2p)

    if (m_pad, h_pad) != (m, hidden):
        out2d = out2d[:m, :hidden]
    out = out2d.reshape(batch, seq, hidden)
    return out if out.dtype == x.dtype else out.astype(x.dtype)


def _reference(x, w1, b1, w2, b2):
    # Pure-JAX f32 reference (no dropout) for a sanity check.
    h = _gelu_tanh(jnp.einsum("bsh,hi->bsi", x, w1) + b1)
    return jnp.einsum("bsi,ih->bsh", h, w2) + b2


if __name__ == "__main__":
    # Small shapes consistent with the module.
    batch, seq = 2, 8
    hidden_size = 32
    intermediate_size = 128
    resid_pdrop = 0.1

    key = jax.random.PRNGKey(0)
    kx, kw1, kb1, kw2, kb2 = jax.random.split(key, 5)

    x = jax.random.normal(kx, (batch, seq, hidden_size), dtype=jnp.float32)
    # "Linear" parameters in (in_features, out_features) layout (== x @ W.T of
    # a PyTorch Linear with weight (out, in)).
    w1 = jax.random.normal(kw1, (hidden_size, intermediate_size), jnp.float32) * 0.02
    b1 = jax.random.normal(kb1, (intermediate_size,), jnp.float32) * 0.02
    w2 = jax.random.normal(kw2, (intermediate_size, hidden_size), jnp.float32) * 0.02
    b2 = jax.random.normal(kb2, (hidden_size,), jnp.float32) * 0.02

    # Pad/cast the weights ONCE (do not redo per forward call).
    w1p, b1p, w2p, b2p = prepare_fused_mlp_params(w1, b1, w2, b2)

    # Sanity check with dropout disabled (bf16 matmul path -> loose tolerance).
    out_nodrop = fused_mlp(x, w1p, b1p, w2p, b2p, resid_pdrop=0.0, seed=0)
    jax.block_until_ready(out_nodrop)
    ref = _reference(x, w1, b1, w2, b2)
    assert jnp.allclose(out_nodrop, ref, atol=5e-2, rtol=5e-2)

    # Full forward (fused bias+gelu, fused bias+dropout).
    out = fused_mlp(x, w1p, b1p, w2p, b2p, resid_pdrop=resid_pdrop, seed=1234)
    jax.block_until_ready(out)

    assert out.shape == (batch, seq, hidden_size)
    assert out.dtype == jnp.float32
    print("KERNEL_OK")
</pallas_src>

<mosaic_0001>
module attributes {stable_mosaic.version = 11 : i64} {
  func.func @fused_mlp_kernel(%arg0: i32, %arg1: i32, %arg2: memref<1xi32, #tpu.memory_space<smem>>, %arg3: memref<16x128xbf16, #tpu.memory_space<vmem>>, %arg4: memref<128x128xbf16, #tpu.memory_space<vmem>>, %arg5: memref<1x128xf32, #tpu.memory_space<vmem>>, %arg6: memref<128x128xbf16, #tpu.memory_space<vmem>>, %arg7: memref<1x128xf32, #tpu.memory_space<vmem>>, %arg8: memref<16x128xf32, #tpu.memory_space<vmem>>) attributes {dimension_semantics = [#tpu.dimension_semantics<parallel>, #tpu.dimension_semantics<arbitrary>], iteration_bounds = array<i64: 1, 1>, scalar_prefetch = 1 : i64, scratch_operands = 0 : i64, tpu.core_type = #tpu.core_type<tc>, window_params = [{transform_indices = @transform_0, window_bounds = array<i64: 16, 128>}, {transform_indices = @transform_1, window_bounds = array<i64: 128, 128>}, {transform_indices = @transform_2, window_bounds = array<i64: 1, 128>}, {transform_indices = @transform_3, window_bounds = array<i64: 128, 128>}, {pipeline_mode = #tpu.pipeline_mode<synchronous>, transform_indices = @transform_4, window_bounds = array<i64: 1, 128>}, {transform_indices = @transform_5, window_bounds = array<i64: 16, 128>}]} {
    %c0_i32 = arith.constant 0 : i32
    %0 = arith.cmpi eq, %arg1, %c0_i32 : i32
    %1 = arith.extui %0 : i1 to i32
    %c0_i32_0 = arith.constant 0 : i32
    %2 = arith.cmpi ne, %1, %c0_i32_0 : i32
    scf.if %2 {
      %cst_19 = arith.constant 0.000000e+00 : f32
      %31 = vector.broadcast %cst_19 : f32 to vector<16x128xf32>
      %c0_20 = arith.constant 0 : index
      %c0_21 = arith.constant 0 : index
      %32 = vector.load %arg8[%c0_20, %c0_21] : memref<16x128xf32, #tpu.memory_space<vmem>>, vector<16x128xf32>
      tpu.vector_store %arg8[%c0_20, %c0_21], %31 {strides = array<i32>} : memref<16x128xf32, #tpu.memory_space<vmem>>, vector<16x128xf32>,
    } else {
    }
    %c0 = arith.constant 0 : index
    %c0_1 = arith.constant 0 : index
    %3 = vector.load %arg3[%c0, %c0_1] : memref<16x128xbf16, #tpu.memory_space<vmem>>, vector<16x128xbf16>
    %c0_2 = arith.constant 0 : index
    %c0_3 = arith.constant 0 : index
    %4 = vector.load %arg4[%c0_2, %c0_3] : memref<128x128xbf16, #tpu.memory_space<vmem>>, vector<128x128xbf16>
    %cst = arith.constant dense<0.000000e+00> : vector<16x128xf32>
    %5 = tpu.matmul %3, %4, %cst {dimension_numbers = #tpu.dot_dimension_numbers<[1], [0], [0], [1], [0, 0, 1, 1], [], []>} : vector<16x128xbf16>, vector<128x128xbf16>, vector<16x128xf32> -> vector<16x128xf32>
    %c0_4 = arith.constant 0 : index
    %c0_5 = arith.constant 0 : index
    %6 = vector.load %arg5[%c0_4, %c0_5] : memref<1x128xf32, #tpu.memory_space<vmem>>, vector<1x128xf32>
    %7 = vector.broadcast %6 : vector<1x128xf32> to vector<16x128xf32>
    %8 = arith.addf %5, %7 : vector<16x128xf32>
    %cst_6 = arith.constant 5.000000e-01 : f32
    %9 = vector.broadcast %cst_6 : f32 to vector<16x128xf32>
    %10 = arith.mulf %9, %8 : vector<16x128xf32>
    %cst_7 = arith.constant 4.471500e-02 : f32
    %11 = vector.broadcast %cst_7 : f32 to vector<16x128xf32>
    %12 = arith.mulf %11, %8 : vector<16x128xf32>
    %13 = arith.mulf %12, %8 : vector<16x128xf32>
    %14 = arith.mulf %13, %8 : vector<16x128xf32>
    %15 = arith.addf %8, %14 : vector<16x128xf32>
    %cst_8 = arith.constant 0.797884583 : f32
    %16 = vector.broadcast %cst_8 : f32 to vector<16x128xf32>
    %17 = arith.mulf %16, %15 : vector<16x128xf32>
    %18 = math.tanh %17 : vector<16x128xf32>
    %cst_9 = arith.constant 1.000000e+00 : f32
    %19 = vector.broadcast %cst_9 : f32 to vector<16x128xf32>
    %20 = arith.addf %19, %18 : vector<16x128xf32>
    %21 = arith.mulf %10, %20 : vector<16x128xf32>
    %c0_10 = arith.constant 0 : index
    %c0_11 = arith.constant 0 : index
    %22 = vector.load %arg8[%c0_10, %c0_11] : memref<16x128xf32, #tpu.memory_space<vmem>>, vector<16x128xf32>
    %23 = arith.truncf %21 : vector<16x128xf32> to vector<16x128xbf16>
    %c0_12 = arith.constant 0 : index
    %c0_13 = arith.constant 0 : index
    %24 = vector.load %arg6[%c0_12, %c0_13] : memref<128x128xbf16, #tpu.memory_space<vmem>>, vector<128x128xbf16>
    %cst_14 = arith.constant dense<0.000000e+00> : vector<16x128xf32>
    %25 = tpu.matmul %23, %24, %cst_14 {dimension_numbers = #tpu.dot_dimension_numbers<[1], [0], [0], [1], [0, 0, 1, 1], [], []>} : vector<16x128xbf16>, vector<128x128xbf16>, vector<16x128xf32> -> vector<16x128xf32>
    %26 = arith.addf %22, %25 : vector<16x128xf32>
    %c0_15 = arith.constant 0 : index
    %c0_16 = arith.constant 0 : index
    %27 = vector.load %arg8[%c0_15, %c0_16] : memref<16x128xf32, #tpu.memory_space<vmem>>, vector<16x128xf32>
    tpu.vector_store %arg8[%c0_15, %c0_16], %26 {strides = array<i32>} : memref<16x128xf32, #tpu.memory_space<vmem>>, vector<16x128xf32>,
    %c0_i32_17 = arith.constant 0 : i32
    %28 = arith.cmpi eq, %arg1, %c0_i32_17 : i32
    %29 = arith.extui %28 : i1 to i32
    %c0_i32_18 = arith.constant 0 : i32
    %30 = arith.cmpi ne, %29, %c0_i32_18 : i32
    scf.if %30 {
      %c0_19 = arith.constant 0 : index
      %c0_20 = arith.constant 0 : index
      %31 = vector.load %arg8[%c0_19, %c0_20] : memref<16x128xf32, #tpu.memory_space<vmem>>, vector<16x128xf32>
      %c0_21 = arith.constant 0 : index
      %c0_22 = arith.constant 0 : index
      %32 = vector.load %arg7[%c0_21, %c0_22] : memref<1x128xf32, #tpu.memory_space<vmem>>, vector<1x128xf32>
      %33 = vector.broadcast %32 : vector<1x128xf32> to vector<16x128xf32>
      %34 = arith.addf %31, %33 : vector<16x128xf32>
      %c0_23 = arith.constant 0 : index
      %c0_24 = arith.constant 0 : index
      %35 = vector.load %arg8[%c0_23, %c0_24] : memref<16x128xf32, #tpu.memory_space<vmem>>, vector<16x128xf32>
      tpu.vector_store %arg8[%c0_23, %c0_24], %34 {strides = array<i32>} : memref<16x128xf32, #tpu.memory_space<vmem>>, vector<16x128xf32>,
    } else {
    }
    return
  }
  func.func @transform_0(%arg0: i32, %arg1: i32, %arg2: memref<1xi32, #tpu.memory_space<smem>>) -> (i32, i32) {
    %c0_i32 = arith.constant 0 : i32
    %c0_i32_0 = arith.constant 0 : i32
    return %arg0, %c0_i32 : i32, i32
  }
  func.func @transform_1(%arg0: i32, %arg1: i32, %arg2: memref<1xi32, #tpu.memory_space<smem>>) -> (i32, i32) {
    %c0_i32 = arith.constant 0 : i32
    %c0_i32_0 = arith.constant 0 : i32
    return %c0_i32, %arg1 : i32, i32
  }
  func.func @transform_2(%arg0: i32, %arg1: i32, %arg2: memref<1xi32, #tpu.memory_space<smem>>) -> (i32, i32) {
    %c0_i32 = arith.constant 0 : i32
    %c0_i32_0 = arith.constant 0 : i32
    return %c0_i32, %arg1 : i32, i32
  }
  func.func @transform_3(%arg0: i32, %arg1: i32, %arg2: memref<1xi32, #tpu.memory_space<smem>>) -> (i32, i32) {
    %c0_i32 = arith.constant 0 : i32
    %c0_i32_0 = arith.constant 0 : i32
    return %arg1, %c0_i32 : i32, i32
  }
  func.func @transform_4(%arg0: i32, %arg1: i32, %arg2: memref<1xi32, #tpu.memory_space<smem>>) -> (i32, i32) {
    %c0_i32 = arith.constant 0 : i32
    %c0_i32_0 = arith.constant 0 : i32
    %c0_i32_1 = arith.constant 0 : i32
    return %c0_i32, %c0_i32_0 : i32, i32
  }
  func.func @transform_5(%arg0: i32, %arg1: i32, %arg2: memref<1xi32, #tpu.memory_space<smem>>) -> (i32, i32) {
    %c0_i32 = arith.constant 0 : i32
    %c0_i32_0 = arith.constant 0 : i32
    return %arg0, %c0_i32 : i32, i32
  }
}

</mosaic_0001>

<llo_original>
// kernel: tpu_custom_call.1
$region0: #{tpu_custom_call.1}
  #allocation0 [shape = 'u32[]', space=smem, size = 0x4, offset = 0x4, fixed_abs, tag = 'smem constant byte address 0x4 - core index']
  #allocation1 [shape = 'u32[144,128]{1,0:T(1,128)}', space=vmem, size = 0x12000, scoped, tag = 'internal scratch']
  #allocation2 [shape = 's32[1]{0}', space=sflag, size = 0x4, scoped, tag = 'scoped memory for tpu_custom_call.1']
  #allocation3 [shape = 's32[1]{0:T(128)S(6)}', space=smem, size = 0x200, scoped, tag = 'prefetched SMEM operand 0']
  %s0 = inlined_call_operand.<no memory space> [shape: s32[1], index: 0, kind: input, shape index: {}]
  %s1 = inlined_call_operand.hbm [shape: bf16[16,128], index: 1, kind: input, shape index: {}]
  %s2 = inlined_call_operand.hbm [shape: bf16[128,128], index: 2, kind: input, shape index: {}]
  %s3 = inlined_call_operand.vmem [shape: f32[1,128], index: 3, kind: input, shape index: {}]
  %s4 = inlined_call_operand.hbm [shape: bf16[128,128], index: 4, kind: input, shape index: {}]
  %s5 = inlined_call_operand.vmem [shape: f32[1,128], index: 5, kind: input, shape index: {}]
  %s6 = inlined_call_operand.hbm [shape: f32[16,128], index: 6, kind: output, shape index: {}]
  %s7 = sld [smem:[#allocation0]]
  $region50: #{tpu_custom_call.1} parent=0
    _
  %s9 = ssub.s32 1, %s7
  %s10 = scalar_select 0, %s9, %s7
  %11 = sst [smem:[#allocation3]] %s0
  $region1: #{tpu_custom_call.1} parent=0
    #allocation4 [shape = 'u8[4096]{0}', space=vmem, size = 0x1000, scoped, tag = 'input window, operand 1, single buffered']
    #allocation5 [shape = 's32[1]{0}', space=sflag, size = 0x4, scoped, tag = 'scoped memory for tpu_custom_call.1']
    #allocation6 [shape = 's32[1]{0}', space=sflag, size = 0x4, scoped, tag = 'scoped memory for tpu_custom_call.1']
    #allocation7 [shape = 'u8[32768]{0}', space=vmem, size = 0x8000, scoped, tag = 'input window, operand 2, single buffered']
    #allocation8 [shape = 's32[1]{0}', space=sflag, size = 0x4, scoped, tag = 'scoped memory for tpu_custom_call.1']
    #allocation9 [shape = 'u8[32768]{0}', space=vmem, size = 0x8000, scoped, tag = 'input window, operand 4, single buffered']
    #allocation10 [shape = 'u8[8192]{0}', space=vmem, size = 0x2000, scoped, tag = 'output window, operand 0, single buffered']
    %12 = vsyncpa [#allocation5], 0
    %13 = vsyncpa [#allocation8], 0
    %14 = vsyncpa [#allocation6], 0
    // Predicated region
    $region2: #{tpu_custom_call.1} parent=1 // pred_check
      _
    $region3: #{tpu_custom_call.1} parent=1 // pred_check_branch
      %16 = sbr.rel (0) target = $region5
    $region4: #{tpu_custom_call.1} parent=1 // pred_region
      %s18 = ssub.s32 128, 128
      %19 = vsyncadd [#allocation5], %s18
      %s20 = sshll.u32 [#allocation4], 4
      %s21 = int_to_ptr.vmem [resolvable:$true] %s20
      %26 = dma.hbm_to_vmem [thread:$0]  %s1, 128, %s21, [#allocation5], 64, 64, 4
    $region5: #{tpu_custom_call.1} parent=1 // pred_fallthru
      _
    // Predicated region
    $region6: #{tpu_custom_call.1} parent=1 // pred_check
      _
    $region7: #{tpu_custom_call.1} parent=1 // pred_check_branch
      %28 = sbr.rel (0) target = $region9
    $region8: #{tpu_custom_call.1} parent=1 // pred_region
      %s30 = ssub.s32 1024, 1024
      %31 = vsyncadd [#allocation8], %s30
      %s32 = sshll.u32 [#allocation7], 4
      %s33 = int_to_ptr.vmem [resolvable:$true] %s32
      %38 = dma.hbm_to_vmem [thread:$0]  %s2, 1024, %s33, [#allocation8], 64, 64, 4
    $region9: #{tpu_custom_call.1} parent=1 // pred_fallthru
      _
    // Predicated region
    $region10: #{tpu_custom_call.1} parent=1 // pred_check
      _
    $region11: #{tpu_custom_call.1} parent=1 // pred_check_branch
      %40 = sbr.rel (0) target = $region13
    $region12: #{tpu_custom_call.1} parent=1 // pred_region
      _
    $region13: #{tpu_custom_call.1} parent=1 // pred_fallthru
      _
    // Predicated region
    $region14: #{tpu_custom_call.1} parent=1 // pred_check
      _
    $region15: #{tpu_custom_call.1} parent=1 // pred_check_branch
      %42 = sbr.rel (0) target = $region17
    $region16: #{tpu_custom_call.1} parent=1 // pred_region
      %s44 = ssub.s32 1024, 1024
      %45 = vsyncadd [#allocation8], %s44
      %s46 = sshll.u32 [#allocation9], 4
      %s47 = int_to_ptr.vmem [resolvable:$true] %s46
      %52 = dma.hbm_to_vmem [thread:$0]  %s4, 1024, %s47, [#allocation8], 64, 64, 4
    $region17: #{tpu_custom_call.1} parent=1 // pred_fallthru
      _
    // Predicated region
    $region18: #{tpu_custom_call.1} parent=1 // pred_check
      _
    $region19: #{tpu_custom_call.1} parent=1 // pred_check_branch
      %54 = sbr.rel (0) target = $region21
    $region20: #{tpu_custom_call.1} parent=1 // pred_region
      _
    $region21: #{tpu_custom_call.1} parent=1 // pred_fallthru
      _
    // Predicated region
    $region22: #{tpu_custom_call.1} parent=1 // pred_check
      _
    $region23: #{tpu_custom_call.1} parent=1 // pred_check_branch
      %56 = sbr.rel (0) target = $region25
    $region24: #{tpu_custom_call.1} parent=1 // pred_region
      %57 = dma.done [#allocation5], 128
    $region25: #{tpu_custom_call.1} parent=1 // pred_fallthru
      _
    // Predicated region
    $region26: #{tpu_custom_call.1} parent=1 // pred_check
      _
    $region27: #{tpu_custom_call.1} parent=1 // pred_check_branch
      %59 = sbr.rel (0) target = $region29
    $region28: #{tpu_custom_call.1} parent=1 // pred_region
      %60 = dma.done [#allocation8], 1024
    $region29: #{tpu_custom_call.1} parent=1 // pred_fallthru
      _
    // Predicated region
    $region30: #{tpu_custom_call.1} parent=1 // pred_check
      _
    $region31: #{tpu_custom_call.1} parent=1 // pred_check_branch
      %62 = sbr.rel (0) target = $region33
    $region32: #{tpu_custom_call.1} parent=1 // pred_region
      %63 = dma.done [#allocation8], 1024
    $region33: #{tpu_custom_call.1} parent=1 // pred_fallthru
      _
    %p65 = scmp.eq.s32.totalorder 0, 0
    // Predicated region
    $region34: #{tpu_custom_call.1} parent=1 // pred_check
      %p66 = pneg %p65
    $region35: #{tpu_custom_call.1} parent=1 // pred_check_branch
      %68 = sbr.rel (%p66) target = $region37
    $region36: #{tpu_custom_call.1} parent=1 // pred_region
      %69 = vst [vmem:[#allocation10] sm:$0xff] 0.0
      %70 = vst [vmem:[#allocation10 + $0x8] sm:$0xff] 0.0
    $region37: #{tpu_custom_call.1} parent=1 // pred_fallthru
      _
    %v71 = vld [vmem:[#allocation4] sm:$0xf]
    %v72 = vld [vmem:[#allocation4 + $0x4] sm:$0xf]
    %v73 = vld [vmem:[#allocation7] sm:$0xf]
    %v74 = vld [vmem:[#allocation7 + $0x4] sm:$0xf]
    %v75 = vld [vmem:[#allocation7 + $0x8] sm:$0xf]
    %v76 = vld [vmem:[#allocation7 + $0xc] sm:$0xf]
    %v77 = vld [vmem:[#allocation7 + $0x10] sm:$0xf]
    %v78 = vld [vmem:[#allocation7 + $0x14] sm:$0xf]
    %v79 = vld [vmem:[#allocation7 + $0x18] sm:$0xf]
    %v80 = vld [vmem:[#allocation7 + $0x1c] sm:$0xf]
    %v81 = vld [vmem:[#allocation7 + $0x20] sm:$0xf]
    %v82 = vld [vmem:[#allocation7 + $0x24] sm:$0xf]
    %v83 = vld [vmem:[#allocation7 + $0x28] sm:$0xf]
    %v84 = vld [vmem:[#allocation7 + $0x2c] sm:$0xf]
    %v85 = vld [vmem:[#allocation7 + $0x30] sm:$0xf]
    %v86 = vld [vmem:[#allocation7 + $0x34] sm:$0xf]
    %v87 = vld [vmem:[#allocation7 + $0x38] sm:$0xf]
    %v88 = vld [vmem:[#allocation7 + $0x3c] sm:$0xf]
    %v89 = vld [vmem:[%s3] sm:$0x1]
    %v91 = vlaneseq
    %v92 = vshrl.u32 %v91, 7
    %v93 = vsub.s32 0, %v92
    %v94 = vrot.slane %v89, %v93
    %v98 = vunpack.c.l.b16 %v71
    %v99 = vunpack.c.l.b16 %v72
    %v100 = vpack.c.b16 %v99, %v98
    %v118 = vunpack.c.l.b16 %v73
    %v119 = vunpack.c.l.b16 %v74
    %v120 = vunpack.c.l.b16 %v75
    %v121 = vunpack.c.l.b16 %v76
    %v122 = vunpack.c.l.b16 %v77
    %v123 = vunpack.c.l.b16 %v78
    %v124 = vunpack.c.l.b16 %v79
    %v125 = vunpack.c.l.b16 %v80
    %v126 = vunpack.c.l.b16 %v81
    %v127 = vunpack.c.l.b16 %v82
    %v128 = vunpack.c.l.b16 %v83
    %v129 = vunpack.c.l.b16 %v84
    %v130 = vunpack.c.l.b16 %v85
    %v131 = vunpack.c.l.b16 %v86
    %v132 = vunpack.c.l.b16 %v87
    %v133 = vunpack.c.l.b16 %v88
    %v134 = vpack.c.b16 %v119, %v118
    %v135 = vpack.c.b16 %v121, %v120
    %v136 = vpack.c.b16 %v123, %v122
    %v137 = vpack.c.b16 %v125, %v124
    %v138 = vpack.c.b16 %v127, %v126
    %v139 = vpack.c.b16 %v129, %v128
    %v140 = vpack.c.b16 %v131, %v130
    %v141 = vpack.c.b16 %v133, %v132
    %150 = vmatprep.subr.bf16.mxu0 0
    %151 = vmatpush1.bf16.msra.mxu0 %v134
    %152 = vmatprep.subr.bf16.mxu0 0
    %153 = vmatpush1.bf16.msra.mxu0 %v135
    %154 = vmatprep.subr.bf16.mxu0 0
    %155 = vmatpush1.bf16.msra.mxu0 %v136
    %156 = vmatprep.subr.bf16.mxu0 0
    %157 = vmatpush1.bf16.msra.mxu0 %v137
    %158 = vmatprep.subr.bf16.mxu0 0
    %159 = vmatpush1.bf16.msra.mxu0 %v138
    %160 = vmatprep.subr.bf16.mxu0 0
    %161 = vmatpush1.bf16.msra.mxu0 %v139
    %162 = vmatprep.subr.bf16.mxu0 0
    %163 = vmatpush1.bf16.msra.mxu0 %v140
    %164 = vmatprep.subr.bf16.mxu0 0
    %165 = vmatpush1.bf16.msra.mxu0 %v141
    %166 = vmatprep.subr.bf16.mxu0 0
    %167 = vmatpush1.bf16.msra.mxu0 0
    %168 = vmatprep.subr.bf16.mxu0 0
    %169 = vmatpush1.bf16.msra.mxu0 0
    %170 = vmatprep.subr.bf16.mxu0 0
    %171 = vmatpush1.bf16.msra.mxu0 0
    %172 = vmatprep.subr.bf16.mxu0 0
    %173 = vmatpush1.bf16.msra.mxu0 0
    %174 = vmatprep.subr.bf16.mxu0 0
    %175 = vmatpush1.bf16.msra.mxu0 0
    %176 = vmatprep.subr.bf16.mxu0 0
    %177 = vmatpush1.bf16.msra.mxu0 0
    %178 = vmatprep.subr.bf16.mxu0 0
    %179 = vmatpush1.bf16.msra.mxu0 0
    %180 = vmatprep.subr.bf16.mxu0 0
    %181 = vmatpush1.bf16.msra.mxu0 0
    %182 = vmatprep.mubr.bf16.mxu0 0
    %183 = vmatmul.mubr.bf16.gmra.mrb[0].mxu0 %v100
    %v184 = vpop.f32.mrb[0].mxu0
    %v185 = vadd.f32 %v94, %v184
    %v186 = vpop.f32.mrb[0].mxu0
    %v187 = vpop.f32.mrb[0].mxu0
    %v188 = vadd.f32 %v94, %v187
    %v189 = vpop.f32.mrb[0].mxu0
    %190 = vdwg.mxu0
    %v191 = vmul.f32 %v185, 0.5
    %v192 = vmul.f32 %v188, 0.5
    %v193 = vmul.f32 %v185, 0.044715
    %v194 = vmul.f32 %v188, 0.044715
    %v195 = vmul.f32 %v193, %v185
    %v196 = vmul.f32 %v194, %v188
    %v197 = vmul.f32 %v195, %v185
    %v198 = vmul.f32 %v196, %v188
    %v199 = vadd.f32 %v185, %v197
    %v200 = vadd.f32 %v188, %v198
    %v201 = vmul.f32 %v199, 0.7978846
    %v202 = vmul.f32 %v200, 0.7978846
    %v203 = vtanh.pop %v201
    %v204 = vtanh.pop %v202
    %v205 = vadd.f32 %v203, 1.0
    %v206 = vadd.f32 %v204, 1.0
    %v207 = vmul.f32 %v191, %v205
    %v208 = vmul.f32 %v192, %v206
    %v209 = vld [vmem:[#allocation10] sm:$0xff]
    %v210 = vld [vmem:[#allocation10 + $0x8] sm:$0xff]
    %v211 = vpack.c.bf16 %v208, %v207
    %v212 = vld [vmem:[#allocation9] sm:$0xf]
    %v213 = vld [vmem:[#allocation9 + $0x4] sm:$0xf]
    %v214 = vld [vmem:[#allocation9 + $0x8] sm:$0xf]
    %v215 = vld [vmem:[#allocation9 + $0xc] sm:$0xf]
    %v216 = vld [vmem:[#allocation9 + $0x10] sm:$0xf]
    %v217 = vld [vmem:[#allocation9 + $0x14] sm:$0xf]
    %v218 = vld [vmem:[#allocation9 + $0x18] sm:$0xf]
    %v219 = vld [vmem:[#allocation9 + $0x1c] sm:$0xf]
    %v220 = vld [vmem:[#allocation9 + $0x20] sm:$0xf]
    %v221 = vld [vmem:[#allocation9 + $0x24] sm:$0xf]
    %v222 = vld [vmem:[#allocation9 + $0x28] sm:$0xf]
    %v223 = vld [vmem:[#allocation9 + $0x2c] sm:$0xf]
    %v224 = vld [vmem:[#allocation9 + $0x30] sm:$0xf]
    %v225 = vld [vmem:[#allocation9 + $0x34] sm:$0xf]
    %v226 = vld [vmem:[#allocation9 + $0x38] sm:$0xf]
    %v227 = vld [vmem:[#allocation9 + $0x3c] sm:$0xf]
    %v244 = vunpack.c.l.b16 %v212
    %v245 = vunpack.c.l.b16 %v213
    %v246 = vunpack.c.l.b16 %v214
    %v247 = vunpack.c.l.b16 %v215
    %v248 = vunpack.c.l.b16 %v216
    %v249 = vunpack.c.l.b16 %v217
    %v250 = vunpack.c.l.b16 %v218
    %v251 = vunpack.c.l.b16 %v219
    %v252 = vunpack.c.l.b16 %v220
    %v253 = vunpack.c.l.b16 %v221
    %v254 = vunpack.c.l.b16 %v222
    %v255 = vunpack.c.l.b16 %v223
    %v256 = vunpack.c.l.b16 %v224
    %v257 = vunpack.c.l.b16 %v225
    %v258 = vunpack.c.l.b16 %v226
    %v259 = vunpack.c.l.b16 %v227
    %v260 = vpack.c.b16 %v245, %v244
    %v261 = vpack.c.b16 %v247, %v246
    %v262 = vpack.c.b16 %v249, %v248
    %v263 = vpack.c.b16 %v251, %v250
    %v264 = vpack.c.b16 %v253, %v252
    %v265 = vpack.c.b16 %v255, %v254
    %v266 = vpack.c.b16 %v257, %v256
    %v267 = vpack.c.b16 %v259, %v258
    %276 = vmatprep.subr.bf16.mxu0 0
    %277 = vmatpush1.bf16.msra.mxu0 %v260
    %278 = vmatprep.subr.bf16.mxu0 0
    %279 = vmatpush1.bf16.msra.mxu0 %v261
    %280 = vmatprep.subr.bf16.mxu0 0
    %281 = vmatpush1.bf16.msra.mxu0 %v262
    %282 = vmatprep.subr.bf16.mxu0 0
    %283 = vmatpush1.bf16.msra.mxu0 %v263
    %284 = vmatprep.subr.bf16.mxu0 0
    %285 = vmatpush1.bf16.msra.mxu0 %v264
    %286 = vmatprep.subr.bf16.mxu0 0
    %287 = vmatpush1.bf16.msra.mxu0 %v265
    %288 = vmatprep.subr.bf16.mxu0 0
    %289 = vmatpush1.bf16.msra.mxu0 %v266
    %290 = vmatprep.subr.bf16.mxu0 0
    %291 = vmatpush1.bf16.msra.mxu0 %v267
    %292 = vmatprep.subr.bf16.mxu0 0
    %293 = vmatpush1.bf16.msra.mxu0 0
    %294 = vmatprep.subr.bf16.mxu0 0
    %295 = vmatpush1.bf16.msra.mxu0 0
    %296 = vmatprep.subr.bf16.mxu0 0
    %297 = vmatpush1.bf16.msra.mxu0 0
    %298 = vmatprep.subr.bf16.mxu0 0
    %299 = vmatpush1.bf16.msra.mxu0 0
    %300 = vmatprep.subr.bf16.mxu0 0
    %301 = vmatpush1.bf16.msra.mxu0 0
    %302 = vmatprep.subr.bf16.mxu0 0
    %303 = vmatpush1.bf16.msra.mxu0 0
    %304 = vmatprep.subr.bf16.mxu0 0
    %305 = vmatpush1.bf16.msra.mxu0 0
    %306 = vmatprep.subr.bf16.mxu0 0
    %307 = vmatpush1.bf16.msra.mxu0 0
    %308 = vmatprep.mubr.bf16.mxu0 0
    %309 = vmatmul.mubr.bf16.gmra.mrb[0].mxu0 %v211
    %v310 = vpop.f32.mrb[0].mxu0
    %v311 = vadd.f32 0.0, %v310
    %v312 = vpop.f32.mrb[0].mxu0
    %v313 = vpop.f32.mrb[0].mxu0
    %v314 = vadd.f32 0.0, %v313
    %v315 = vpop.f32.mrb[0].mxu0
    %316 = vdwg.mxu0
    %v317 = vadd.f32 %v209, %v311
    %v318 = vadd.f32 %v210, %v314
    %319 = vst [vmem:[#allocation10] sm:$0xff] %v317
    %320 = vst [vmem:[#allocation10 + $0x8] sm:$0xff] %v318
    // Predicated region
    $region38: #{tpu_custom_call.1} parent=1 // pred_check
      %p321 = pneg %p65
    $region39: #{tpu_custom_call.1} parent=1 // pred_check_branch
      %323 = sbr.rel (%p321) target = $region41
    $region40: #{tpu_custom_call.1} parent=1 // pred_region
      %v324 = vld [vmem:[#allocation10] sm:$0xff]
      %v325 = vld [vmem:[#allocation10 + $0x8] sm:$0xff]
      %v326 = vld [vmem:[%s5] sm:$0x1]
      %v328 = vlaneseq
      %v329 = vshrl.u32 %v328, 7
      %v330 = vsub.s32 0, %v329
      %v331 = vrot.slane %v326, %v330
      %v333 = vadd.f32 %v324, %v331
      %v334 = vadd.f32 %v325, %v331
      %335 = vst [vmem:[#allocation10] sm:$0xff] %v333
      %336 = vst [vmem:[#allocation10 + $0x8] sm:$0xff] %v334
    $region41: #{tpu_custom_call.1} parent=1 // pred_fallthru
      _
    // Predicated region
    $region42: #{tpu_custom_call.1} parent=1 // pred_check
      _
    $region43: #{tpu_custom_call.1} parent=1 // pred_check_branch
      %338 = sbr.rel (0) target = $region45
    $region44: #{tpu_custom_call.1} parent=1 // pred_region
      %s340 = ssub.s32 256, 256
      %341 = vsyncadd [#allocation6], %s340
      %s342 = sshll.u32 [#allocation10], 4
      %s343 = int_to_ptr.vmem [resolvable:$true] %s342
      %348 = dma.vmem_to_hbm [thread:$0]  %s343, 256, %s6, [#allocation6], 128, 128, 8
    $region45: #{tpu_custom_call.1} parent=1 // pred_fallthru
      _
    // Predicated region
    $region46: #{tpu_custom_call.1} parent=1 // pred_check
      _
    $region47: #{tpu_custom_call.1} parent=1 // pred_check_branch
      %350 = sbr.rel (0) target = $region49
    $region48: #{tpu_custom_call.1} parent=1 // pred_region
      %351 = dma.done [#allocation6], 256
    $region49: #{tpu_custom_call.1} parent=1 // pred_fallthru
      _
    %352 = vsyncpa [#allocation5], 1
    %353 = vsyncpa [#allocation8], 1
    %354 = vsyncpa [#allocation6], 1

</llo_original>
